<compile_context>
chip_gen: v7x
topology: tpu7x:2x2x1
jax: 0.10.0
libtpu: 0.0.40
codegen_flags: <defaults>
</compile_context>

<pallas_src>
import jax
import jax.numpy as jnp
from jax.experimental import pallas as pl
from jax.experimental.pallas import tpu as pltpu

LANE = 128


def bert_classifier_kernel(emb_ref, vlen_ref, wp_ref, bp_ref, wc_ref, bc_ref,
                           out_ref, acc_ref):
    """One (batch_tile, seq_tile) grid step of the fused classifier head."""
    s_idx = pl.program_id(1)
    tb, ts, _ = emb_ref.shape

    @pl.when(s_idx == 0)
    def _init():
        acc_ref[...] = jnp.zeros_like(acc_ref)

    # gen_attention_mask for this sequence tile: mask[b, s] = (s < valid_length[b])
    pos = s_idx * ts + jax.lax.broadcasted_iota(jnp.int32, (tb, ts), dimension=1)
    mask = (pos < vlen_ref[...]).astype(emb_ref.dtype)              # [tb, ts]

    # Masked partial sum over the sequence on the MXU:
    #   [tb, 1, ts] @ [tb, ts, H] -> [tb, 1, H], accumulated in f32.
    part = jnp.einsum("bqs,bsh->bqh", mask[:, None, :], emb_ref[...],
                      preferred_element_type=jnp.float32)
    acc_ref[...] += part[:, 0, :]

    @pl.when(s_idx == pl.num_programs(1) - 1)
    def _finalize():
        # Masked mean: divide by valid_length directly (no mask-sum reduce);
        # EUP approx reciprocal is effectively free here.
        denom = jnp.maximum(vlen_ref[...], 1).astype(jnp.float32)   # [tb, 1]
        pooled = acc_ref[...] * pl.reciprocal(denom, approx=True)   # [tb, H] f32

        # BERT pooler: dense + tanh (f32 MXU / EUP).
        pooler = jnp.tanh(
            jnp.dot(pooled, wp_ref[...], preferred_element_type=jnp.float32)
            + bp_ref[...])

        # TODO(synk): dropout omitted — dr_rate=None in the reference config.

        # Classifier head: lane-dense output (num_classes padded to 128).
        out_ref[...] = (
            jnp.dot(pooler, wc_ref[...], preferred_element_type=jnp.float32)
            + bc_ref[...])


def _pick_tile(dim, cap, align=8):
    """Largest tile <= cap that divides dim; full dim is always legal."""
    if dim <= cap:
        return dim
    t = cap - (cap % align)
    while t >= align:
        if dim % t == 0:
            return t
        t -= align
    return dim  # fall back to the full (untiled) dimension


def bert_classifier_forward(token_ids, valid_length, segment_ids, params):
    """JAX glue: embedding gather (bf16), then one gridded fused Pallas call."""
    tok_table = params["tok_emb"]       # [V, H]
    seg_table = params["seg_emb"]       # [2, H]
    w_pool = params["w_pool"]           # [H, H]
    b_pool = params["b_pool"]           # [1, H]
    w_cls = params["w_cls"]             # [H, C]
    b_cls = params["b_cls"]             # [1, C]

    B, S = token_ids.shape
    H = tok_table.shape[1]
    C = w_cls.shape[1]
    CP = pl.cdiv(C, LANE) * LANE        # lane-dense classifier width

    # Embedding lookup (gather) stays in XLA; stream activations as bf16.
    emb = (tok_table[token_ids] + seg_table[segment_ids]).astype(jnp.bfloat16)
    vlen = valid_length.astype(jnp.int32).reshape(B, 1)

    # Pad the classifier weights/bias to the lane-dense width.
    w_cls_p = jnp.zeros((H, CP), jnp.float32).at[:, :C].set(w_cls)
    b_cls_p = jnp.zeros((1, CP), jnp.float32).at[:, :C].set(b_cls)

    tb = _pick_tile(B, 8)
    ts = _pick_tile(S, 512)
    grid = (B // tb, S // ts)

    # VMEM budget: emb block is double-buffered; weights stay resident.
    # Sized with v7x (64 MiB physical / 32 MiB scoped default) headroom in mind.
    emb_block_bytes = tb * ts * H * 2
    weight_bytes = (H * H + H + H * CP + CP) * 4
    vmem_limit = min(48 << 20,
                     max(16 << 20, 4 * emb_block_bytes + 2 * weight_bytes + (2 << 20)))

    cost = pl.CostEstimate(
        flops=2 * B * S * H + 2 * B * H * H + 2 * B * H * CP,
        transcendentals=B * H + B,
        bytes_accessed=(emb.size * 2 + vlen.size * 4
                        + (w_pool.size + b_pool.size) * 4
                        + (w_cls_p.size + b_cls_p.size) * 4
                        + B * CP * 4))

    grid_spec = pltpu.PrefetchScalarGridSpec(
        num_scalar_prefetch=0,
        grid=grid,
        in_specs=[
            pl.BlockSpec((tb, ts, H), lambda b, s: (b, s, 0)),   # emb (streamed, bf16)
            pl.BlockSpec((tb, 1), lambda b, s: (b, 0)),          # valid_length
            pl.BlockSpec((H, H), lambda b, s: (0, 0)),           # w_pool (resident)
            pl.BlockSpec((1, H), lambda b, s: (0, 0)),           # b_pool (resident)
            pl.BlockSpec((H, CP), lambda b, s: (0, 0)),          # w_cls padded (resident)
            pl.BlockSpec((1, CP), lambda b, s: (0, 0)),          # b_cls padded (resident)
        ],
        out_specs=pl.BlockSpec((tb, CP), lambda b, s: (b, 0)),
        scratch_shapes=[pltpu.VMEM((tb, H), jnp.float32)],
    )

    out_padded = pl.pallas_call(
        bert_classifier_kernel,
        out_shape=jax.ShapeDtypeStruct((B, CP), jnp.float32),
        grid_spec=grid_spec,
        compiler_params=pltpu.CompilerParams(
            dimension_semantics=("parallel", "arbitrary"),
            vmem_limit_bytes=int(vmem_limit)),
        cost_estimate=cost,
    )(emb, vlen, w_pool, b_pool, w_cls_p, b_cls_p)

    return out_padded[:, :C]


def make_params(key, vocab_size=50, hidden_size=32, num_classes=7):
    k1, k2, k3, k4, k5, k6 = jax.random.split(key, 6)
    scale = 0.02
    return {
        "tok_emb": scale * jax.random.normal(k1, (vocab_size, hidden_size), jnp.float32),
        "seg_emb": scale * jax.random.normal(k2, (2, hidden_size), jnp.float32),
        "w_pool": scale * jax.random.normal(k3, (hidden_size, hidden_size), jnp.float32),
        "b_pool": scale * jax.random.normal(k4, (1, hidden_size), jnp.float32),
        "w_cls": scale * jax.random.normal(k5, (hidden_size, num_classes), jnp.float32),
        "b_cls": scale * jax.random.normal(k6, (1, num_classes), jnp.float32),
    }


if __name__ == "__main__":
    B, S, H, C, V = 2, 8, 32, 7, 50

    key = jax.random.PRNGKey(0)
    kp, kt, ks = jax.random.split(key, 3)

    params = make_params(kp, vocab_size=V, hidden_size=H, num_classes=C)

    token_ids = jax.random.randint(kt, (B, S), 0, V, dtype=jnp.int32)
    segment_ids = jax.random.randint(ks, (B, S), 0, 2, dtype=jnp.int32)
    valid_length = jnp.array([5, 8], dtype=jnp.int32)   # assumed <= S (as in the module)

    logits = bert_classifier_forward(token_ids, valid_length, segment_ids, params)
    logits = jax.block_until_ready(logits)

    assert logits.shape == (B, C), logits.shape
    assert logits.dtype == jnp.float32

    # pure-JAX reference (same bf16 embedding storage, f32 accumulation)
    emb = (params["tok_emb"][token_ids]
           + params["seg_emb"][segment_ids]).astype(jnp.bfloat16).astype(jnp.float32)
    pos = jnp.arange(S)[None, :]
    mask = (pos < valid_length[:, None]).astype(jnp.float32)
    denom = jnp.maximum(valid_length[:, None], 1).astype(jnp.float32)
    pooled = jnp.einsum("bs,bsh->bh", mask, emb) / denom
    pooler = jnp.tanh(pooled @ params["w_pool"] + params["b_pool"])
    ref = pooler @ params["w_cls"] + params["b_cls"]
    assert jnp.allclose(logits, ref, atol=1e-4, rtol=1e-4), (
        float(jnp.max(jnp.abs(logits - ref))))

    print("KERNEL_OK")
</pallas_src>

<mosaic_0001>
module attributes {stable_mosaic.version = 11 : i64} {
  func.func @bert_classifier_kernel(%arg0: i32, %arg1: i32, %arg2: memref<2x8x32xbf16, #tpu.memory_space<vmem>>, %arg3: memref<2x1xi32, #tpu.memory_space<vmem>>, %arg4: memref<32x32xf32, #tpu.memory_space<vmem>>, %arg5: memref<1x32xf32, #tpu.memory_space<vmem>>, %arg6: memref<32x128xf32, #tpu.memory_space<vmem>>, %arg7: memref<1x128xf32, #tpu.memory_space<vmem>>, %arg8: memref<2x128xf32, #tpu.memory_space<vmem>>, %arg9: memref<2x32xf32, #tpu.memory_space<vmem>>) attributes {dimension_semantics = [#tpu.dimension_semantics<parallel>, #tpu.dimension_semantics<arbitrary>], iteration_bounds = array<i64: 1, 1>, scalar_prefetch = 0 : i64, scratch_operands = 1 : i64, tpu.core_type = #tpu.core_type<tc>, window_params = [{transform_indices = @transform_0, window_bounds = array<i64: 2, 8, 32>}, {transform_indices = @transform_1, window_bounds = array<i64: 2, 1>}, {pipeline_mode = #tpu.pipeline_mode<synchronous>, transform_indices = @transform_2, window_bounds = array<i64: 32, 32>}, {pipeline_mode = #tpu.pipeline_mode<synchronous>, transform_indices = @transform_3, window_bounds = array<i64: 1, 32>}, {pipeline_mode = #tpu.pipeline_mode<synchronous>, transform_indices = @transform_4, window_bounds = array<i64: 32, 128>}, {pipeline_mode = #tpu.pipeline_mode<synchronous>, transform_indices = @transform_5, window_bounds = array<i64: 1, 128>}, {transform_indices = @transform_6, window_bounds = array<i64: 2, 128>}]} {
    %c0_i32 = arith.constant 0 : i32
    %0 = arith.cmpi eq, %arg1, %c0_i32 : i32
    %1 = arith.extui %0 : i1 to i32
    %c0_i32_0 = arith.constant 0 : i32
    %2 = arith.cmpi ne, %1, %c0_i32_0 : i32
    scf.if %2 {
      %cst_11 = arith.constant 0.000000e+00 : f32
      %23 = vector.broadcast %cst_11 : f32 to vector<2x32xf32>
      %c0_12 = arith.constant 0 : index
      %c0_13 = arith.constant 0 : index
      %24 = vector.load %arg9[%c0_12, %c0_13] : memref<2x32xf32, #tpu.memory_space<vmem>>, vector<2x32xf32>
      tpu.vector_store %arg9[%c0_12, %c0_13], %23 {strides = array<i32>} : memref<2x32xf32, #tpu.memory_space<vmem>>, vector<2x32xf32>,
    } else {
    }
    %c8_i32 = arith.constant 8 : i32
    %3 = arith.muli %arg1, %c8_i32 : i32
    %4 = tpu.iota {dimensions = array<i32: 1>} : vector<2x8xi32>
    %5 = vector.broadcast %3 : i32 to vector<2x8xi32>
    %6 = arith.addi %5, %4 : vector<2x8xi32>
    %c0 = arith.constant 0 : index
    %c0_1 = arith.constant 0 : index
    %7 = vector.load %arg3[%c0, %c0_1] : memref<2x1xi32, #tpu.memory_space<vmem>>, vector<2x1xi32>
    %8 = vector.broadcast %7 : vector<2x1xi32> to vector<2x8xi32>
    %9 = arith.cmpi slt, %6, %8 : vector<2x8xi32>
    %10 = arith.extui %9 : vector<2x8xi1> to vector<2x8xi32>
    %11 = arith.sitofp %10 : vector<2x8xi32> to vector<2x8xf32>
    %12 = arith.truncf %11 : vector<2x8xf32> to vector<2x8xbf16>
    %13 = vector.shape_cast %12 : vector<2x8xbf16> to vector<2x1x8xbf16>
    %c0_2 = arith.constant 0 : index
    %c0_3 = arith.constant 0 : index
    %c0_4 = arith.constant 0 : index
    %14 = vector.load %arg2[%c0_2, %c0_3, %c0_4] : memref<2x8x32xbf16, #tpu.memory_space<vmem>>, vector<2x8x32xbf16>
    "tpu.trace_start"() <{level = 10 : i32, message = "bqs,bsh->bqh"}> : () -> ()
    %cst = arith.constant dense<0.000000e+00> : vector<2x1x32xf32>
    %15 = tpu.matmul %13, %14, %cst {dimension_numbers = #tpu.dot_dimension_numbers<[2], [1], [1], [2], [0, 0, 0, 1, 1, 2], [0], [0]>} : vector<2x1x8xbf16>, vector<2x8x32xbf16>, vector<2x1x32xf32> -> vector<2x1x32xf32>
    "tpu.trace_stop"() : () -> ()
    %c0_5 = arith.constant 0 : index
    %c0_6 = arith.constant 0 : index
    %16 = vector.load %arg9[%c0_5, %c0_6] : memref<2x32xf32, #tpu.memory_space<vmem>>, vector<2x32xf32>
    %17 = vector.shape_cast %15 : vector<2x1x32xf32> to vector<2x32xf32>
    %18 = arith.addf %16, %17 : vector<2x32xf32>
    %c0_7 = arith.constant 0 : index
    %c0_8 = arith.constant 0 : index
    %19 = vector.load %arg9[%c0_7, %c0_8] : memref<2x32xf32, #tpu.memory_space<vmem>>, vector<2x32xf32>
    tpu.vector_store %arg9[%c0_7, %c0_8], %18 {strides = array<i32>} : memref<2x32xf32, #tpu.memory_space<vmem>>, vector<2x32xf32>,
    %c0_i32_9 = arith.constant 0 : i32
    %20 = arith.cmpi eq, %arg1, %c0_i32_9 : i32
    %21 = arith.extui %20 : i1 to i32
    %c0_i32_10 = arith.constant 0 : i32
    %22 = arith.cmpi ne, %21, %c0_i32_10 : i32
    scf.if %22 {
      %c0_11 = arith.constant 0 : index
      %c0_12 = arith.constant 0 : index
      %23 = vector.load %arg3[%c0_11, %c0_12] : memref<2x1xi32, #tpu.memory_space<vmem>>, vector<2x1xi32>
      %c1_i32 = arith.constant 1 : i32
      %24 = vector.broadcast %c1_i32 : i32 to vector<2x1xi32>
      %25 = arith.maxsi %23, %24 : vector<2x1xi32>
      %26 = arith.sitofp %25 : vector<2x1xi32> to vector<2x1xf32>
      %c0_13 = arith.constant 0 : index
      %c0_14 = arith.constant 0 : index
      %27 = vector.load %arg9[%c0_13, %c0_14] : memref<2x32xf32, #tpu.memory_space<vmem>>, vector<2x32xf32>
      %28 = tpu.reciprocal %26 {approx = true} : vector<2x1xf32> -> vector<2x1xf32>
      %29 = vector.broadcast %28 : vector<2x1xf32> to vector<2x32xf32>
      %30 = arith.mulf %27, %29 : vector<2x32xf32>
      %c0_15 = arith.constant 0 : index
      %c0_16 = arith.constant 0 : index
      %31 = vector.load %arg4[%c0_15, %c0_16] : memref<32x32xf32, #tpu.memory_space<vmem>>, vector<32x32xf32>
      %cst_17 = arith.constant dense<0.000000e+00> : vector<2x32xf32>
      %32 = tpu.matmul %30, %31, %cst_17 {dimension_numbers = #tpu.dot_dimension_numbers<[1], [0], [0], [1], [0, 0, 1, 1], [], []>} : vector<2x32xf32>, vector<32x32xf32>, vector<2x32xf32> -> vector<2x32xf32>
      %c0_18 = arith.constant 0 : index
      %c0_19 = arith.constant 0 : index
      %33 = vector.load %arg5[%c0_18, %c0_19] : memref<1x32xf32, #tpu.memory_space<vmem>>, vector<1x32xf32>
      %34 = vector.broadcast %33 : vector<1x32xf32> to vector<2x32xf32>
      %35 = arith.addf %32, %34 : vector<2x32xf32>
      %36 = math.tanh %35 : vector<2x32xf32>
      %c0_20 = arith.constant 0 : index
      %c0_21 = arith.constant 0 : index
      %37 = vector.load %arg6[%c0_20, %c0_21] : memref<32x128xf32, #tpu.memory_space<vmem>>, vector<32x128xf32>
      %cst_22 = arith.constant dense<0.000000e+00> : vector<2x128xf32>
      %38 = tpu.matmul %36, %37, %cst_22 {dimension_numbers = #tpu.dot_dimension_numbers<[1], [0], [0], [1], [0, 0, 1, 1], [], []>} : vector<2x32xf32>, vector<32x128xf32>, vector<2x128xf32> -> vector<2x128xf32>
      %c0_23 = arith.constant 0 : index
      %c0_24 = arith.constant 0 : index
      %39 = vector.load %arg7[%c0_23, %c0_24] : memref<1x128xf32, #tpu.memory_space<vmem>>, vector<1x128xf32>
      %40 = vector.broadcast %39 : vector<1x128xf32> to vector<2x128xf32>
      %41 = arith.addf %38, %40 : vector<2x128xf32>
      %c0_25 = arith.constant 0 : index
      %c0_26 = arith.constant 0 : index
      %42 = vector.load %arg8[%c0_25, %c0_26] : memref<2x128xf32, #tpu.memory_space<vmem>>, vector<2x128xf32>
      tpu.vector_store %arg8[%c0_25, %c0_26], %41 {strides = array<i32>} : memref<2x128xf32, #tpu.memory_space<vmem>>, vector<2x128xf32>,
    } else {
    }
    return
  }
  func.func @transform_0(%arg0: i32, %arg1: i32) -> (i32, i32, i32) {
    %c0_i32 = arith.constant 0 : i32
    %c0_i32_0 = arith.constant 0 : i32
    return %arg0, %arg1, %c0_i32 : i32, i32, i32
  }
  func.func @transform_1(%arg0: i32, %arg1: i32) -> (i32, i32) {
    %c0_i32 = arith.constant 0 : i32
    %c0_i32_0 = arith.constant 0 : i32
    return %arg0, %c0_i32 : i32, i32
  }
  func.func @transform_2(%arg0: i32, %arg1: i32) -> (i32, i32) {
    %c0_i32 = arith.constant 0 : i32
    %c0_i32_0 = arith.constant 0 : i32
    %c0_i32_1 = arith.constant 0 : i32
    return %c0_i32, %c0_i32_0 : i32, i32
  }
  func.func @transform_3(%arg0: i32, %arg1: i32) -> (i32, i32) {
    %c0_i32 = arith.constant 0 : i32
    %c0_i32_0 = arith.constant 0 : i32
    %c0_i32_1 = arith.constant 0 : i32
    return %c0_i32, %c0_i32_0 : i32, i32
  }
  func.func @transform_4(%arg0: i32, %arg1: i32) -> (i32, i32) {
    %c0_i32 = arith.constant 0 : i32
    %c0_i32_0 = arith.constant 0 : i32
    %c0_i32_1 = arith.constant 0 : i32
    return %c0_i32, %c0_i32_0 : i32, i32
  }
  func.func @transform_5(%arg0: i32, %arg1: i32) -> (i32, i32) {
    %c0_i32 = arith.constant 0 : i32
    %c0_i32_0 = arith.constant 0 : i32
    %c0_i32_1 = arith.constant 0 : i32
    return %c0_i32, %c0_i32_0 : i32, i32
  }
  func.func @transform_6(%arg0: i32, %arg1: i32) -> (i32, i32) {
    %c0_i32 = arith.constant 0 : i32
    %c0_i32_0 = arith.constant 0 : i32
    return %arg0, %c0_i32 : i32, i32
  }
}

</mosaic_0001>

<llo_original>
// kernel: tpu_custom_call.1
$region0: #{tpu_custom_call.1}
  #allocation0 [shape = 'u32[]', space=smem, size = 0x4, offset = 0x4, fixed_abs, tag = 'smem constant byte address 0x4 - core index']
  #allocation1 [shape = 'u32[144,128]{1,0:T(1,128)}', space=vmem, size = 0x12000, scoped, tag = 'internal scratch']
  #allocation2 [shape = 'f32[2,32]{1,0:T(2,128)}', space=vmem, size = 0x400, scoped, tag = 'scratch operand']
  %s0 = inlined_call_operand.hbm [shape: bf16[2,8,32], index: 0, kind: input, shape index: {}]
  %s1 = inlined_call_operand.vmem [shape: s32[2,1], index: 1, kind: input, shape index: {}]
  %s2 = inlined_call_operand.hbm [shape: f32[32,32], index: 2, kind: input, shape index: {}]
  %s3 = inlined_call_operand.vmem [shape: f32[1,32], index: 3, kind: input, shape index: {}]
  %s4 = inlined_call_operand.hbm [shape: f32[32,128], index: 4, kind: input, shape index: {}]
  %s5 = inlined_call_operand.vmem [shape: f32[1,128], index: 5, kind: input, shape index: {}]
  %s6 = inlined_call_operand.hbm [shape: f32[2,128], index: 6, kind: output, shape index: {}]
  %s7 = sld [smem:[#allocation0]]
  $region54: #{tpu_custom_call.1} parent=0
    _
  %s9 = ssub.s32 1, %s7
  %s10 = scalar_select 0, %s9, %s7
  $region1: #{tpu_custom_call.1} parent=0
    #allocation3 [shape = 'u8[4096]{0}', space=vmem, size = 0x1000, scoped, tag = 'input window, operand 0, single buffered']
    #allocation4 [shape = 's32[1]{0}', space=sflag, size = 0x4, scoped, tag = 'scoped memory for tpu_custom_call.1']
    #allocation5 [shape = 's32[1]{0}', space=sflag, size = 0x4, scoped, tag = 'scoped memory for tpu_custom_call.1']
    #allocation6 [shape = 'u8[16384]{0}', space=vmem, size = 0x4000, scoped, tag = 'input window, operand 2, single buffered']
    #allocation7 [shape = 's32[1]{0}', space=sflag, size = 0x4, scoped, tag = 'scoped memory for tpu_custom_call.1']
    #allocation8 [shape = 'u8[16384]{0}', space=vmem, size = 0x4000, scoped, tag = 'input window, operand 4, single buffered']
    #allocation9 [shape = 'u8[1024]{0}', space=vmem, size = 0x400, scoped, tag = 'output window, operand 0, single buffered']
    %11 = vsyncpa [#allocation4], 0
    %12 = vsyncpa [#allocation7], 0
    %13 = vsyncpa [#allocation5], 0
    // Predicated region
    $region2: #{tpu_custom_call.1} parent=1 // pred_check
      _
    $region3: #{tpu_custom_call.1} parent=1 // pred_check_branch
      %15 = sbr.rel (0) target = $region5
    $region4: #{tpu_custom_call.1} parent=1 // pred_region
      %s17 = ssub.s32 128, 128
      %18 = vsyncadd [#allocation4], %s17
      %s19 = sshll.u32 [#allocation3], 4
      %s20 = int_to_ptr.vmem [resolvable:$true] %s19
      %25 = dma.hbm_to_vmem [thread:$0]  %s0, 128, %s20, [#allocation4], 64, 64, 4
    $region5: #{tpu_custom_call.1} parent=1 // pred_fallthru
      _
    // Predicated region
    $region6: #{tpu_custom_call.1} parent=1 // pred_check
      _
    $region7: #{tpu_custom_call.1} parent=1 // pred_check_branch
      %27 = sbr.rel (0) target = $region9
    $region8: #{tpu_custom_call.1} parent=1 // pred_region
      _
    $region9: #{tpu_custom_call.1} parent=1 // pred_fallthru
      _
    // Predicated region
    $region10: #{tpu_custom_call.1} parent=1 // pred_check
      _
    $region11: #{tpu_custom_call.1} parent=1 // pred_check_branch
      %29 = sbr.rel (0) target = $region13
    $region12: #{tpu_custom_call.1} parent=1 // pred_region
      %s31 = ssub.s32 512, 512
      %32 = vsyncadd [#allocation7], %s31
      %s33 = sshll.u32 [#allocation6], 4
      %s34 = int_to_ptr.vmem [resolvable:$true] %s33
      %39 = dma.hbm_to_vmem [thread:$0]  %s2, 512, %s34, [#allocation7], 128, 128, 8
    $region13: #{tpu_custom_call.1} parent=1 // pred_fallthru
      _
    // Predicated region
    $region14: #{tpu_custom_call.1} parent=1 // pred_check
      _
    $region15: #{tpu_custom_call.1} parent=1 // pred_check_branch
      %41 = sbr.rel (0) target = $region17
    $region16: #{tpu_custom_call.1} parent=1 // pred_region
      _
    $region17: #{tpu_custom_call.1} parent=1 // pred_fallthru
      _
    // Predicated region
    $region18: #{tpu_custom_call.1} parent=1 // pred_check
      _
    $region19: #{tpu_custom_call.1} parent=1 // pred_check_branch
      %43 = sbr.rel (0) target = $region21
    $region20: #{tpu_custom_call.1} parent=1 // pred_region
      %s45 = ssub.s32 512, 512
      %46 = vsyncadd [#allocation7], %s45
      %s47 = sshll.u32 [#allocation8], 4
      %s48 = int_to_ptr.vmem [resolvable:$true] %s47
      %53 = dma.hbm_to_vmem [thread:$0]  %s4, 512, %s48, [#allocation7], 128, 128, 8
    $region21: #{tpu_custom_call.1} parent=1 // pred_fallthru
      _
    // Predicated region
    $region22: #{tpu_custom_call.1} parent=1 // pred_check
      _
    $region23: #{tpu_custom_call.1} parent=1 // pred_check_branch
      %55 = sbr.rel (0) target = $region25
    $region24: #{tpu_custom_call.1} parent=1 // pred_region
      _
    $region25: #{tpu_custom_call.1} parent=1 // pred_fallthru
      _
    // Predicated region
    $region26: #{tpu_custom_call.1} parent=1 // pred_check
      _
    $region27: #{tpu_custom_call.1} parent=1 // pred_check_branch
      %57 = sbr.rel (0) target = $region29
    $region28: #{tpu_custom_call.1} parent=1 // pred_region
      %58 = dma.done [#allocation4], 128
    $region29: #{tpu_custom_call.1} parent=1 // pred_fallthru
      _
    // Predicated region
    $region30: #{tpu_custom_call.1} parent=1 // pred_check
      _
    $region31: #{tpu_custom_call.1} parent=1 // pred_check_branch
      %60 = sbr.rel (0) target = $region33
    $region32: #{tpu_custom_call.1} parent=1 // pred_region
      %61 = dma.done [#allocation7], 512
    $region33: #{tpu_custom_call.1} parent=1 // pred_fallthru
      _
    // Predicated region
    $region34: #{tpu_custom_call.1} parent=1 // pred_check
      _
    $region35: #{tpu_custom_call.1} parent=1 // pred_check_branch
      %63 = sbr.rel (0) target = $region37
    $region36: #{tpu_custom_call.1} parent=1 // pred_region
      %64 = dma.done [#allocation7], 512
    $region37: #{tpu_custom_call.1} parent=1 // pred_fallthru
      _
    %p66 = scmp.eq.s32.totalorder 0, 0
    // Predicated region
    $region38: #{tpu_custom_call.1} parent=1 // pred_check
      %p67 = pneg %p66
    $region39: #{tpu_custom_call.1} parent=1 // pred_check_branch
      %69 = sbr.rel (%p67) target = $region41
    $region40: #{tpu_custom_call.1} parent=1 // pred_region
      %vm70 = vcmask 254976
      %71 = vst.msk [vmem:[#allocation2] sm:$0x3] %vm70, 0.0
    $region41: #{tpu_custom_call.1} parent=1 // pred_fallthru
      _
    %s72 = smul.u32 0, 8
    %v73 = vlaneseq
    %v74 = vand.u32 %v73, 127
    %v75 = vstv %s72
    %v76 = vadd.s32 %v75, %v74
    %v77 = vld [vmem:[%s1] sm:$0x3]
    %78 = vset.pattern.permute.xlu0 0
    %79 = vperm.xlu0 %78, %v77
    %v80 = vpop.permute.xlu0 %79
    %vm81 = vcmp.lt.s32.totalorder %v76, %v80
    %v82 = vsel %vm81, 1, 0
    %v83 = vcvt.s32.f32 %v82
    %v84 = vpack.c.bf16 %v83, %v83
    %v87 = vunpack.c.l.s4 1966171168
    %v88 = vunpack.c.0.s8 %v87
    %v89 = vlaneseq
    %v90 = vshrl.u32 %v89, 7
    %v91 = vsub.s32 %v88, %v90
    %v92 = vrot.slane %v84, %v91
    %v94 = vunpack.c.l.s4 1966171168
    %v95 = vunpack.c.0.s8 %v94
    %v96 = vlaneseq
    %v97 = vshrl.u32 %v96, 7
    %v98 = vsub.s32 %v95, %v97
    %v99 = vrot.slane %v92, %v98
    %v100 = vunpack.i.l.s16 %v99
    %v101 = vunpack.i.h.s16 %v99
    %v102 = vld [vmem:[#allocation3] sm:$0xf]
    %v103 = vld [vmem:[#allocation3 + $0x4] sm:$0xf]
    %v104 = vpack.i.b16 %v100, %v100
    %v105 = vlaneseq
    %v106 = vshrl.u32 %v105, 7
    %v107 = vsub.s32 0, %v106
    %v108 = vrot.slane %v104, %v107
    %vm109 = vcmask 64512
    %v111 = vsel %vm109, %v108, 0
    %vm113 = vcmask 1043456
    %v115 = vsel %vm113, %v102, 0
    %117 = vmatprep.subr.bf16.mxu0 0
    %118 = vmatpush1.bf16.msra.mxu0 %v115
    %119 = vmatprep.subr.bf16.mxu0 0
    %120 = vmatpush1.bf16.msra.mxu0 0
    %121 = vmatprep.subr.bf16.mxu0 0
    %122 = vmatpush1.bf16.msra.mxu0 0
    %123 = vmatprep.subr.bf16.mxu0 0
    %124 = vmatpush1.bf16.msra.mxu0 0
    %125 = vmatprep.subr.bf16.mxu0 0
    %126 = vmatpush1.bf16.msra.mxu0 0
    %127 = vmatprep.subr.bf16.mxu0 0
    %128 = vmatpush1.bf16.msra.mxu0 0
    %129 = vmatprep.subr.bf16.mxu0 0
    %130 = vmatpush1.bf16.msra.mxu0 0
    %131 = vmatprep.subr.bf16.mxu0 0
    %132 = vmatpush1.bf16.msra.mxu0 0
    %133 = vmatprep.subr.bf16.mxu0 0
    %134 = vmatpush1.bf16.msra.mxu0 0
    %135 = vmatprep.subr.bf16.mxu0 0
    %136 = vmatpush1.bf16.msra.mxu0 0
    %137 = vmatprep.subr.bf16.mxu0 0
    %138 = vmatpush1.bf16.msra.mxu0 0
    %139 = vmatprep.subr.bf16.mxu0 0
    %140 = vmatpush1.bf16.msra.mxu0 0
    %141 = vmatprep.subr.bf16.mxu0 0
    %142 = vmatpush1.bf16.msra.mxu0 0
    %143 = vmatprep.subr.bf16.mxu0 0
    %144 = vmatpush1.bf16.msra.mxu0 0
    %145 = vmatprep.subr.bf16.mxu0 0
    %146 = vmatpush1.bf16.msra.mxu0 0
    %147 = vmatprep.subr.bf16.mxu0 0
    %148 = vmatpush1.bf16.msra.mxu0 0
    %149 = vmatprep.mubr.bf16.mxu0 0
    %150 = vmatmul.mubr.bf16.gmra.mrb[0].mxu0 %v111
    %v151 = vpop.f32.mrb[0].mxu0
    %v152 = vadd.f32 0.0, %v151
    %v153 = vpop.f32.mrb[0].mxu0
    %v154 = vpop.f32.mrb[0].mxu0
    %v155 = vpop.f32.mrb[0].mxu0
    %156 = vdwg.mxu0
    %v157 = vpack.i.b16 %v101, %v101
    %v158 = vlaneseq
    %v159 = vshrl.u32 %v158, 7
    %v160 = vsub.s32 0, %v159
    %v161 = vrot.slane %v157, %v160
    %v163 = vsel %vm109, %v161, 0
    %v166 = vsel %vm113, %v103, 0
    %168 = vmatprep.subr.bf16.mxu0 0
    %169 = vmatpush1.bf16.msra.mxu0 %v166
    %170 = vmatprep.subr.bf16.mxu0 0
    %171 = vmatpush1.bf16.msra.mxu0 0
    %172 = vmatprep.subr.bf16.mxu0 0
    %173 = vmatpush1.bf16.msra.mxu0 0
    %174 = vmatprep.subr.bf16.mxu0 0
    %175 = vmatpush1.bf16.msra.mxu0 0
    %176 = vmatprep.subr.bf16.mxu0 0
    %177 = vmatpush1.bf16.msra.mxu0 0
    %178 = vmatprep.subr.bf16.mxu0 0
    %179 = vmatpush1.bf16.msra.mxu0 0
    %180 = vmatprep.subr.bf16.mxu0 0
    %181 = vmatpush1.bf16.msra.mxu0 0
    %182 = vmatprep.subr.bf16.mxu0 0
    %183 = vmatpush1.bf16.msra.mxu0 0
    %184 = vmatprep.subr.bf16.mxu0 0
    %185 = vmatpush1.bf16.msra.mxu0 0
    %186 = vmatprep.subr.bf16.mxu0 0
    %187 = vmatpush1.bf16.msra.mxu0 0
    %188 = vmatprep.subr.bf16.mxu0 0
    %189 = vmatpush1.bf16.msra.mxu0 0
    %190 = vmatprep.subr.bf16.mxu0 0
    %191 = vmatpush1.bf16.msra.mxu0 0
    %192 = vmatprep.subr.bf16.mxu0 0
    %193 = vmatpush1.bf16.msra.mxu0 0
    %194 = vmatprep.subr.bf16.mxu0 0
    %195 = vmatpush1.bf16.msra.mxu0 0
    %196 = vmatprep.subr.bf16.mxu0 0
    %197 = vmatpush1.bf16.msra.mxu0 0
    %198 = vmatprep.subr.bf16.mxu0 0
    %199 = vmatpush1.bf16.msra.mxu0 0
    %200 = vmatprep.mubr.bf16.mxu0 0
    %201 = vmatmul.mubr.bf16.gmra.mrb[0].mxu0 %v163
    %v202 = vpop.f32.mrb[0].mxu0
    %v203 = vadd.f32 0.0, %v202
    %v204 = vpop.f32.mrb[0].mxu0
    %v205 = vpop.f32.mrb[0].mxu0
    %v206 = vpop.f32.mrb[0].mxu0
    %207 = vdwg.mxu0
    %v208 = vld [vmem:[#allocation2] sm:$0x3]
    %v211 = vrot.slane %v203, 7
    %vm212 = vcmask 1041409
    %v213 = vsel %vm212, %v211, %v152
    %v215 = vadd.f32 %v208, %v213
    %vm216 = vcmask 254976
    %217 = vst.msk [vmem:[#allocation2] sm:$0x3] %vm216, %v215
    // Predicated region
    $region42: #{tpu_custom_call.1} parent=1 // pred_check
      %p218 = pneg %p66
    $region43: #{tpu_custom_call.1} parent=1 // pred_check_branch
      %220 = sbr.rel (%p218) target = $region45
    $region44: #{tpu_custom_call.1} parent=1 // pred_region
      %v221 = vld [vmem:[%s1] sm:$0x3]
      %vm222 = vcmp.gt.s32.totalorder %v221, 1
      %v223 = vsel %vm222, %v221, 1
      %v224 = vcvt.s32.f32 %v223
      %v225 = vld [vmem:[#allocation2] sm:$0x3]
      %v226 = vrcp.pop %v224
      %228 = vset.pattern.permute.xlu0 0
      %229 = vperm.xlu0 %228, %v226
      %v230 = vpop.permute.xlu0 %229
      %v232 = vmul.f32 %v225, %v230
      %v233 = vld [vmem:[#allocation6] sm:$0xff]
      %v234 = vld [vmem:[#allocation6 + $0x8] sm:$0xff]
      %v235 = vld [vmem:[#allocation6 + $0x10] sm:$0xff]
      %v236 = vld [vmem:[#allocation6 + $0x18] sm:$0xff]
      %v237 = vld [vmem:[%s3] sm:$0x1]
      %v239 = vlaneseq
      %v240 = vshrl.u32 %v239, 7
      %v241 = vsub.s32 0, %v240
      %v242 = vrot.slane %v237, %v241
      %vm244 = vcmask 261120
      %v246 = vsel %vm244, %v232, 0
      %248 = vmatprep.subr.mxu0 0.0
      %249 = vmatpush1.msra.mxu0 %v233
      %250 = vmatprep.subr.mxu0 0.0
      %251 = vmatpush1.msra.mxu0 %v234
      %252 = vmatprep.subr.mxu0 0.0
      %253 = vmatpush1.msra.mxu0 %v235
      %254 = vmatprep.subr.mxu0 0.0
      %255 = vmatpush1.msra.mxu0 %v236
      %256 = vmatprep.subr.mxu0 0.0
      %257 = vmatpush1.msra.mxu0 0.0
      %258 = vmatprep.subr.mxu0 0.0
      %259 = vmatpush1.msra.mxu0 0.0
      %260 = vmatprep.subr.mxu0 0.0
      %261 = vmatpush1.msra.mxu0 0.0
      %262 = vmatprep.subr.mxu0 0.0
      %263 = vmatpush1.msra.mxu0 0.0
      %264 = vmatprep.subr.mxu0 0.0
      %265 = vmatpush1.msra.mxu0 0.0
      %266 = vmatprep.subr.mxu0 0.0
      %267 = vmatpush1.msra.mxu0 0.0
      %268 = vmatprep.subr.mxu0 0.0
      %269 = vmatpush1.msra.mxu0 0.0
      %270 = vmatprep.subr.mxu0 0.0
      %271 = vmatpush1.msra.mxu0 0.0
      %272 = vmatprep.subr.mxu0 0.0
      %273 = vmatpush1.msra.mxu0 0.0
      %274 = vmatprep.subr.mxu0 0.0
      %275 = vmatpush1.msra.mxu0 0.0
      %276 = vmatprep.subr.mxu0 0.0
      %277 = vmatpush1.msra.mxu0 0.0
      %278 = vmatprep.subr.mxu0 0.0
      %279 = vmatpush1.msra.mxu0 0.0
      %280 = vmatprep.subr.mxu0 0.0
      %281 = vmatpush1.msra.mxu0 0.0
      %282 = vmatprep.subr.mxu0 0.0
      %283 = vmatpush1.msra.mxu0 0.0
      %284 = vmatprep.subr.mxu0 0.0
      %285 = vmatpush1.msra.mxu0 0.0
      %286 = vmatprep.subr.mxu0 0.0
      %287 = vmatpush1.msra.mxu0 0.0
      %288 = vmatprep.subr.mxu0 0.0
      %289 = vmatpush1.msra.mxu0 0.0
      %290 = vmatprep.subr.mxu0 0.0
      %291 = vmatpush1.msra.mxu0 0.0
      %292 = vmatprep.subr.mxu0 0.0
      %293 = vmatpush1.msra.mxu0 0.0
      %294 = vmatprep.subr.mxu0 0.0
      %295 = vmatpush1.msra.mxu0 0.0
      %296 = vmatprep.subr.mxu0 0.0
      %297 = vmatpush1.msra.mxu0 0.0
      %298 = vmatprep.subr.mxu0 0.0
      %299 = vmatpush1.msra.mxu0 0.0
      %300 = vmatprep.subr.mxu0 0.0
      %301 = vmatpush1.msra.mxu0 0.0
      %302 = vmatprep.subr.mxu0 0.0
      %303 = vmatpush1.msra.mxu0 0.0
      %304 = vmatprep.subr.mxu0 0.0
      %305 = vmatpush1.msra.mxu0 0.0
      %306 = vmatprep.subr.mxu0 0.0
      %307 = vmatpush1.msra.mxu0 0.0
      %308 = vmatprep.subr.mxu0 0.0
      %309 = vmatpush1.msra.mxu0 0.0
      %310 = vmatprep.subr.mxu0 0.0
      %311 = vmatpush1.msra.mxu0 0.0
      %312 = vmatprep.mubr.f32.mxu0 0.0
      %313 = vmatmul.mubr.f32.gmra.mrb[0].mxu0 %v246
      %v314 = vpop.f32.mrb[0].mxu0
      %v315 = vadd.f32 %v242, %v314
      %v316 = vpop.f32.mrb[0].mxu0
      %317 = vdwg.mxu0
      %v318 = vtanh.pop %v315
      %v319 = vld [vmem:[#allocation8] sm:$0xff]
      %v320 = vld [vmem:[#allocation8 + $0x8] sm:$0xff]
      %v321 = vld [vmem:[#allocation8 + $0x10] sm:$0xff]
      %v322 = vld [vmem:[#allocation8 + $0x18] sm:$0xff]
      %v323 = vld [vmem:[%s5] sm:$0x1]
      %v325 = vlaneseq
      %v326 = vshrl.u32 %v325, 7
      %v327 = vsub.s32 0, %v326
      %v328 = vrot.slane %v323, %v327
      %v331 = vsel %vm244, %v318, 0
      %333 = vmatprep.subr.mxu0 0.0
      %334 = vmatpush1.msra.mxu0 %v319
      %335 = vmatprep.subr.mxu0 0.0
      %336 = vmatpush1.msra.mxu0 %v320
      %337 = vmatprep.subr.mxu0 0.0
      %338 = vmatpush1.msra.mxu0 %v321
      %339 = vmatprep.subr.mxu0 0.0
      %340 = vmatpush1.msra.mxu0 %v322
      %341 = vmatprep.subr.mxu0 0.0
      %342 = vmatpush1.msra.mxu0 0.0
      %343 = vmatprep.subr.mxu0 0.0
      %344 = vmatpush1.msra.mxu0 0.0
      %345 = vmatprep.subr.mxu0 0.0
      %346 = vmatpush1.msra.mxu0 0.0
      %347 = vmatprep.subr.mxu0 0.0
      %348 = vmatpush1.msra.mxu0 0.0
      %349 = vmatprep.subr.mxu0 0.0
      %350 = vmatpush1.msra.mxu0 0.0
      %351 = vmatprep.subr.mxu0 0.0
      %352 = vmatpush1.msra.mxu0 0.0
      %353 = vmatprep.subr.mxu0 0.0
      %354 = vmatpush1.msra.mxu0 0.0
      %355 = vmatprep.subr.mxu0 0.0
      %356 = vmatpush1.msra.mxu0 0.0
      %357 = vmatprep.subr.mxu0 0.0
      %358 = vmatpush1.msra.mxu0 0.0
      %359 = vmatprep.subr.mxu0 0.0
      %360 = vmatpush1.msra.mxu0 0.0
      %361 = vmatprep.subr.mxu0 0.0
      %362 = vmatpush1.msra.mxu0 0.0
      %363 = vmatprep.subr.mxu0 0.0
      %364 = vmatpush1.msra.mxu0 0.0
      %365 = vmatprep.subr.mxu0 0.0
      %366 = vmatpush1.msra.mxu0 0.0
      %367 = vmatprep.subr.mxu0 0.0
      %368 = vmatpush1.msra.mxu0 0.0
      %369 = vmatprep.subr.mxu0 0.0
      %370 = vmatpush1.msra.mxu0 0.0
      %371 = vmatprep.subr.mxu0 0.0
      %372 = vmatpush1.msra.mxu0 0.0
      %373 = vmatprep.subr.mxu0 0.0
      %374 = vmatpush1.msra.mxu0 0.0
      %375 = vmatprep.subr.mxu0 0.0
      %376 = vmatpush1.msra.mxu0 0.0
      %377 = vmatprep.subr.mxu0 0.0
      %378 = vmatpush1.msra.mxu0 0.0
      %379 = vmatprep.subr.mxu0 0.0
      %380 = vmatpush1.msra.mxu0 0.0
      %381 = vmatprep.subr.mxu0 0.0
      %382 = vmatpush1.msra.mxu0 0.0
      %383 = vmatprep.subr.mxu0 0.0
      %384 = vmatpush1.msra.mxu0 0.0
      %385 = vmatprep.subr.mxu0 0.0
      %386 = vmatpush1.msra.mxu0 0.0
      %387 = vmatprep.subr.mxu0 0.0
      %388 = vmatpush1.msra.mxu0 0.0
      %389 = vmatprep.subr.mxu0 0.0
      %390 = vmatpush1.msra.mxu0 0.0
      %391 = vmatprep.subr.mxu0 0.0
      %392 = vmatpush1.msra.mxu0 0.0
      %393 = vmatprep.subr.mxu0 0.0
      %394 = vmatpush1.msra.mxu0 0.0
      %395 = vmatprep.subr.mxu0 0.0
      %396 = vmatpush1.msra.mxu0 0.0
      %397 = vmatprep.mubr.f32.mxu0 0.0
      %398 = vmatmul.mubr.f32.gmra.mrb[0].mxu0 %v331
      %v399 = vpop.f32.mrb[0].mxu0
      %v400 = vadd.f32 %v328, %v399
      %v401 = vpop.f32.mrb[0].mxu0
      %402 = vdwg.mxu0
      %403 = vst [vmem:[#allocation9] sm:$0x3] %v400
    $region45: #{tpu_custom_call.1} parent=1 // pred_fallthru
      _
    // Predicated region
    $region46: #{tpu_custom_call.1} parent=1 // pred_check
      _
    $region47: #{tpu_custom_call.1} parent=1 // pred_check_branch
      %405 = sbr.rel (0) target = $region49
    $region48: #{tpu_custom_call.1} parent=1 // pred_region
      %s407 = ssub.s32 32, 32
      %408 = vsyncadd [#allocation5], %s407
      %s410 = sshll.u32 [#allocation9], 4
      %s411 = int_to_ptr.vmem [resolvable:$true] %s410
      %413 = dma.vmem_to_hbm [thread:$0]  %s411, 32, %s6, [#allocation5]
    $region49: #{tpu_custom_call.1} parent=1 // pred_fallthru
      _
    // Predicated region
    $region50: #{tpu_custom_call.1} parent=1 // pred_check
      _
    $region51: #{tpu_custom_call.1} parent=1 // pred_check_branch
      %415 = sbr.rel (0) target = $region53
    $region52: #{tpu_custom_call.1} parent=1 // pred_region
      %416 = dma.done [#allocation5], 32
    $region53: #{tpu_custom_call.1} parent=1 // pred_fallthru
      _
    %417 = vsyncpa [#allocation4], 1
    %418 = vsyncpa [#allocation7], 1
    %419 = vsyncpa [#allocation5], 1

</llo_original>
